<compile_context>
chip_gen: v7x
topology: tpu7x:2x2x1
jax: 0.10.0
libtpu: 0.0.40
codegen_flags: <defaults>
</compile_context>

<pallas_src>
import jax
import jax.numpy as jnp
from jax.experimental import pallas as pl
from jax.experimental.pallas import tpu as pltpu


def _round_up(x, m):
    return ((x + m - 1) // m) * m


def _mlp_kernel(x_ref, w1_ref, b1_ref, w2_ref, b2_ref, w3_ref, b3_ref, o_ref):
    # x_ref: [dim_in, TB]   (batch on the lane axis)
    # w*:    PyTorch layout [out_features, in_features];  b*: [out_features, 1]
    xt = x_ref[...]
    w1 = w1_ref[...]
    w3 = w3_ref[...]
    dim_in = w1.shape[1]
    dim_out, hidden2 = w3.shape

    # ---- Layer 1: Linear(dim_in -> 64) + (dropout = identity) + ReLU ----
    # dim_in is tiny (2 for two-moons): VPU broadcast FMAs, skip the MXU
    # push/pop round trip for a degenerate K.
    if dim_in <= 8:
        h1 = w1[:, 0:1] * xt[0:1, :]                      # [64, TB]
        for k in range(1, dim_in):
            h1 = h1 + w1[:, k:k + 1] * xt[k:k + 1, :]
    else:
        h1 = jnp.dot(w1, xt, preferred_element_type=jnp.float32)
    h1 = jnp.maximum(h1 + b1_ref[...], 0.0)               # bias [64,1] broadcast

    # ---- Layer 2: Linear(64 -> 32) + (dropout = identity) + ReLU ----
    # The only contraction large enough to be worth the MXU.
    h2 = jnp.dot(w2_ref[...], h1, preferred_element_type=jnp.float32)
    h2 = jnp.maximum(h2 + b2_ref[...], 0.0)               # [32, TB]

    # ---- Layer 3: Linear(32 -> dim_out), no activation ----
    # M = dim_out = 2, K = 32 uses <1% of the MXU and drains a sublane-padded
    # result through the serial MXU FIFO -> do it on the VPU as well.
    if dim_out <= 8:
        out = w3[:, 0:1] * h2[0:1, :]                     # [dim_out, TB]
        for k in range(1, hidden2):
            out = out + w3[:, k:k + 1] * h2[k:k + 1, :]
    else:
        out = jnp.dot(w3, h2, preferred_element_type=jnp.float32)
    o_ref[...] = (out + b3_ref[...]).astype(o_ref.dtype)  # [dim_out, TB]


def _choose_tile(B, max_tb):
    """Batch tile width (lanes)."""
    if B <= 128:
        return B                       # one full-array block, no dead lanes
    b_up = _round_up(B, 128)
    tb = min(max_tb, b_up)
    # v7x megacore: if a single tile would cover the whole batch but there is
    # enough work to split, halve it so the "parallel" grid axis has >= 2
    # steps and both TensorCores get work (one cheap extra step on v5e/v6e).
    if tb == b_up and b_up >= 512:
        tb = _round_up(pl.cdiv(b_up, 2), 128)
    return tb


def _padded_bytes(r, c, itemsize=4):
    # Bytes actually moved for an [r, c] f32 operand under (8, 128) tiling.
    return _round_up(r, 8) * _round_up(c, 128) * itemsize


def three_layer_mlp_t(xt, params, *, max_tb=16384):
    """Lane-dense entry point.

    xt: [dim_in, B] float32 (batch on the last/lane axis); returns
    [dim_out, B].  Prefer this in pipelines that keep activations
    feature-major: it adds zero wrapper-side HBM round trips (no transpose /
    pad / slice) -- the ragged batch tail is handled by the partial final
    grid block.
    """
    w1, b1 = params["w1"], params["b1"]   # [64, dim_in], [64, 1]
    w2, b2 = params["w2"], params["b2"]   # [32, 64],     [32, 1]
    w3, b3 = params["w3"], params["b3"]   # [dim_out,32], [dim_out, 1]

    dim_in, B = xt.shape
    dim_out = w3.shape[0]

    tb = _choose_tile(B, max_tb)
    grid = (pl.cdiv(B, tb),)
    n_steps = grid[0]

    # Advisory cost: count bytes that actually move (padded tiles, per step),
    # so XLA schedules around a custom call that is in reality memory-bound.
    param_bytes = sum(_padded_bytes(*p.shape) for p in (w1, b1, w2, b2, w3, b3))
    io_bytes = n_steps * (_padded_bytes(dim_in, tb) + _padded_bytes(dim_out, tb))
    cost = pl.CostEstimate(
        flops=int(2 * n_steps * tb * (dim_in * 64 + 64 * 32 + 32 * dim_out)),
        transcendentals=0,
        bytes_accessed=int(io_bytes + param_bytes),
    )

    # VMEM: double-buffered x/out tiles (rows sublane-padded to 8) + the f32
    # h1/h2 intermediates, ~50% slack for compiler temporaries.  Keep the
    # scoped limit <= 48 MiB so large tiles still fit v7x's 64 MiB VMEM.
    rows = 2 * _round_up(dim_in, 8) + 2 * _round_up(dim_out, 8) + 64 + 32
    vmem_est = int(1.5 * 4 * _round_up(tb, 128) * rows) + (1 << 20)
    vmem_limit = min(max(vmem_est, 32 * 1024 * 1024), 48 * 1024 * 1024)

    # Weights/biases are VMEM-resident: constant index_map => fetched once.
    resident = lambda shape: pl.BlockSpec(shape, lambda i: (0, 0))

    return pl.pallas_call(
        _mlp_kernel,
        out_shape=jax.ShapeDtypeStruct((dim_out, B), jnp.float32),
        grid=grid,
        in_specs=[
            pl.BlockSpec((dim_in, tb), lambda i: (0, i)),   # streamed x tiles
            resident(w1.shape), resident(b1.shape),
            resident(w2.shape), resident(b2.shape),
            resident(w3.shape), resident(b3.shape),
        ],
        out_specs=pl.BlockSpec((dim_out, tb), lambda i: (0, i)),
        compiler_params=pltpu.CompilerParams(
            dimension_semantics=("parallel",),              # megacore on v7x
            vmem_limit_bytes=vmem_limit,
        ),
        cost_estimate=cost,
    )(xt, w1, b1, w2, b2, w3, b3)


def three_layer_mlp(x, params, *, max_tb=16384):
    """PyTorch-style interface: x is [B, dim_in], returns [B, dim_out].

    The two transposes here are the only remaining wrapper-side HBM ops (no
    pad, no slice); callers that already hold activations feature-major
    should use three_layer_mlp_t directly and skip them too.
    """
    return three_layer_mlp_t(x.T, params, max_tb=max_tb).T


def init_params(key, dim_in, dim_out=2):
    """Deterministic init mimicking nn.Linear's U(-1/sqrt(fan_in), 1/sqrt(fan_in)).

    Weights in PyTorch layout [out_features, in_features]; biases as
    [out_features, 1] columns for the lane-dense kernel.
    """
    def linear(k, fan_in, fan_out):
        kw, kb = jax.random.split(k)
        bound = 1.0 / jnp.sqrt(jnp.float32(fan_in))
        w = jax.random.uniform(kw, (fan_out, fan_in), jnp.float32, -bound, bound)
        b = jax.random.uniform(kb, (fan_out, 1), jnp.float32, -bound, bound)
        return w, b

    k1, k2, k3 = jax.random.split(key, 3)
    w1, b1 = linear(k1, dim_in, 64)
    w2, b2 = linear(k2, 64, 32)
    w3, b3 = linear(k3, 32, dim_out)
    return {"w1": w1, "b1": b1, "w2": w2, "b2": b2, "w3": w3, "b3": b3}


def reference(x, p):
    h1 = jnp.maximum(x @ p["w1"].T + p["b1"].T, 0.0)
    h2 = jnp.maximum(h1 @ p["w2"].T + p["b2"].T, 0.0)
    return h2 @ p["w3"].T + p["b3"].T


if __name__ == "__main__":
    key = jax.random.PRNGKey(0)
    k_x, k_p = jax.random.split(key)

    B, DIM_IN, DIM_OUT = 8, 2, 2          # two-moons: 2-D input, 2 classes
    x = jax.random.normal(k_x, (B, DIM_IN), jnp.float32)
    params = init_params(k_p, DIM_IN, DIM_OUT)

    y = jax.block_until_ready(three_layer_mlp(x, params))
    y_ref = reference(x, params)
    assert y.shape == (B, DIM_OUT)
    assert jnp.allclose(y, y_ref, atol=1e-4, rtol=1e-4)

    # Also exercise the multi-step / ragged-tail / megacore path (still tiny).
    xb = jax.random.normal(k_x, (1000, DIM_IN), jnp.float32)
    yb = jax.block_until_ready(three_layer_mlp(xb, params))
    assert jnp.allclose(yb, reference(xb, params), atol=1e-4, rtol=1e-4)

    print("KERNEL_OK")
</pallas_src>

<mosaic_0001>
module attributes {stable_mosaic.version = 11 : i64} {
  func.func @_mlp_kernel(%arg0: i32, %arg1: memref<2x8xf32, #tpu.memory_space<vmem>>, %arg2: memref<64x2xf32, #tpu.memory_space<vmem>>, %arg3: memref<64x1xf32, #tpu.memory_space<vmem>>, %arg4: memref<32x64xf32, #tpu.memory_space<vmem>>, %arg5: memref<32x1xf32, #tpu.memory_space<vmem>>, %arg6: memref<2x32xf32, #tpu.memory_space<vmem>>, %arg7: memref<2x1xf32, #tpu.memory_space<vmem>>, %arg8: memref<2x8xf32, #tpu.memory_space<vmem>>) attributes {dimension_semantics = [#tpu.dimension_semantics<parallel>], iteration_bounds = array<i64: 1>, scalar_prefetch = 0 : i64, scratch_operands = 0 : i64, tpu.core_type = #tpu.core_type<tc>, window_params = [{transform_indices = @transform_0, window_bounds = array<i64: 2, 8>}, {pipeline_mode = #tpu.pipeline_mode<synchronous>, transform_indices = @transform_1, window_bounds = array<i64: 64, 2>}, {pipeline_mode = #tpu.pipeline_mode<synchronous>, transform_indices = @transform_2, window_bounds = array<i64: 64, 1>}, {pipeline_mode = #tpu.pipeline_mode<synchronous>, transform_indices = @transform_3, window_bounds = array<i64: 32, 64>}, {pipeline_mode = #tpu.pipeline_mode<synchronous>, transform_indices = @transform_4, window_bounds = array<i64: 32, 1>}, {pipeline_mode = #tpu.pipeline_mode<synchronous>, transform_indices = @transform_5, window_bounds = array<i64: 2, 32>}, {pipeline_mode = #tpu.pipeline_mode<synchronous>, transform_indices = @transform_6, window_bounds = array<i64: 2, 1>}, {transform_indices = @transform_7, window_bounds = array<i64: 2, 8>}]} {
    %c0 = arith.constant 0 : index
    %c0_0 = arith.constant 0 : index
    %0 = vector.load %arg1[%c0, %c0_0] : memref<2x8xf32, #tpu.memory_space<vmem>>, vector<2x8xf32>
    %c0_1 = arith.constant 0 : index
    %c0_2 = arith.constant 0 : index
    %1 = vector.load %arg2[%c0_1, %c0_2] : memref<64x2xf32, #tpu.memory_space<vmem>>, vector<64x2xf32>
    %c0_3 = arith.constant 0 : index
    %c0_4 = arith.constant 0 : index
    %2 = vector.load %arg6[%c0_3, %c0_4] : memref<2x32xf32, #tpu.memory_space<vmem>>, vector<2x32xf32>
    %3 = vector.extract_strided_slice %1 {offsets = [0, 0], sizes = [64, 1], strides = [1, 1]} : vector<64x2xf32> to vector<64x1xf32>
    %4 = vector.extract_strided_slice %0 {offsets = [0, 0], sizes = [1, 8], strides = [1, 1]} : vector<2x8xf32> to vector<1x8xf32>
    %5 = vector.broadcast %3 : vector<64x1xf32> to vector<64x8xf32>
    %6 = vector.broadcast %4 : vector<1x8xf32> to vector<64x8xf32>
    %7 = arith.mulf %5, %6 : vector<64x8xf32>
    %8 = vector.extract_strided_slice %1 {offsets = [0, 1], sizes = [64, 1], strides = [1, 1]} : vector<64x2xf32> to vector<64x1xf32>
    %9 = vector.extract_strided_slice %0 {offsets = [1, 0], sizes = [1, 8], strides = [1, 1]} : vector<2x8xf32> to vector<1x8xf32>
    %10 = vector.broadcast %8 : vector<64x1xf32> to vector<64x8xf32>
    %11 = vector.broadcast %9 : vector<1x8xf32> to vector<64x8xf32>
    %12 = arith.mulf %10, %11 : vector<64x8xf32>
    %13 = arith.addf %7, %12 : vector<64x8xf32>
    %c0_5 = arith.constant 0 : index
    %c0_6 = arith.constant 0 : index
    %14 = vector.load %arg3[%c0_5, %c0_6] : memref<64x1xf32, #tpu.memory_space<vmem>>, vector<64x1xf32>
    %15 = vector.broadcast %14 : vector<64x1xf32> to vector<64x8xf32>
    %16 = arith.addf %13, %15 : vector<64x8xf32>
    %cst = arith.constant 0.000000e+00 : f32
    %17 = vector.broadcast %cst : f32 to vector<64x8xf32>
    %18 = arith.maximumf %16, %17 : vector<64x8xf32>
    %c0_7 = arith.constant 0 : index
    %c0_8 = arith.constant 0 : index
    %19 = vector.load %arg4[%c0_7, %c0_8] : memref<32x64xf32, #tpu.memory_space<vmem>>, vector<32x64xf32>
    %cst_9 = arith.constant dense<0.000000e+00> : vector<32x8xf32>
    %20 = tpu.matmul %19, %18, %cst_9 {dimension_numbers = #tpu.dot_dimension_numbers<[1], [0], [0], [1], [0, 0, 1, 1], [], []>} : vector<32x64xf32>, vector<64x8xf32>, vector<32x8xf32> -> vector<32x8xf32>
    %c0_10 = arith.constant 0 : index
    %c0_11 = arith.constant 0 : index
    %21 = vector.load %arg5[%c0_10, %c0_11] : memref<32x1xf32, #tpu.memory_space<vmem>>, vector<32x1xf32>
    %22 = vector.broadcast %21 : vector<32x1xf32> to vector<32x8xf32>
    %23 = arith.addf %20, %22 : vector<32x8xf32>
    %cst_12 = arith.constant 0.000000e+00 : f32
    %24 = vector.broadcast %cst_12 : f32 to vector<32x8xf32>
    %25 = arith.maximumf %23, %24 : vector<32x8xf32>
    %26 = vector.extract_strided_slice %2 {offsets = [0, 0], sizes = [2, 1], strides = [1, 1]} : vector<2x32xf32> to vector<2x1xf32>
    %27 = vector.extract_strided_slice %25 {offsets = [0, 0], sizes = [1, 8], strides = [1, 1]} : vector<32x8xf32> to vector<1x8xf32>
    %28 = vector.broadcast %26 : vector<2x1xf32> to vector<2x8xf32>
    %29 = vector.broadcast %27 : vector<1x8xf32> to vector<2x8xf32>
    %30 = arith.mulf %28, %29 : vector<2x8xf32>
    %31 = vector.extract_strided_slice %2 {offsets = [0, 1], sizes = [2, 1], strides = [1, 1]} : vector<2x32xf32> to vector<2x1xf32>
    %32 = vector.extract_strided_slice %25 {offsets = [1, 0], sizes = [1, 8], strides = [1, 1]} : vector<32x8xf32> to vector<1x8xf32>
    %33 = vector.broadcast %31 : vector<2x1xf32> to vector<2x8xf32>
    %34 = vector.broadcast %32 : vector<1x8xf32> to vector<2x8xf32>
    %35 = arith.mulf %33, %34 : vector<2x8xf32>
    %36 = arith.addf %30, %35 : vector<2x8xf32>
    %37 = vector.extract_strided_slice %2 {offsets = [0, 2], sizes = [2, 1], strides = [1, 1]} : vector<2x32xf32> to vector<2x1xf32>
    %38 = vector.extract_strided_slice %25 {offsets = [2, 0], sizes = [1, 8], strides = [1, 1]} : vector<32x8xf32> to vector<1x8xf32>
    %39 = vector.broadcast %37 : vector<2x1xf32> to vector<2x8xf32>
    %40 = vector.broadcast %38 : vector<1x8xf32> to vector<2x8xf32>
    %41 = arith.mulf %39, %40 : vector<2x8xf32>
    %42 = arith.addf %36, %41 : vector<2x8xf32>
    %43 = vector.extract_strided_slice %2 {offsets = [0, 3], sizes = [2, 1], strides = [1, 1]} : vector<2x32xf32> to vector<2x1xf32>
    %44 = vector.extract_strided_slice %25 {offsets = [3, 0], sizes = [1, 8], strides = [1, 1]} : vector<32x8xf32> to vector<1x8xf32>
    %45 = vector.broadcast %43 : vector<2x1xf32> to vector<2x8xf32>
    %46 = vector.broadcast %44 : vector<1x8xf32> to vector<2x8xf32>
    %47 = arith.mulf %45, %46 : vector<2x8xf32>
    %48 = arith.addf %42, %47 : vector<2x8xf32>
    %49 = vector.extract_strided_slice %2 {offsets = [0, 4], sizes = [2, 1], strides = [1, 1]} : vector<2x32xf32> to vector<2x1xf32>
    %50 = vector.extract_strided_slice %25 {offsets = [4, 0], sizes = [1, 8], strides = [1, 1]} : vector<32x8xf32> to vector<1x8xf32>
    %51 = vector.broadcast %49 : vector<2x1xf32> to vector<2x8xf32>
    %52 = vector.broadcast %50 : vector<1x8xf32> to vector<2x8xf32>
    %53 = arith.mulf %51, %52 : vector<2x8xf32>
    %54 = arith.addf %48, %53 : vector<2x8xf32>
    %55 = vector.extract_strided_slice %2 {offsets = [0, 5], sizes = [2, 1], strides = [1, 1]} : vector<2x32xf32> to vector<2x1xf32>
    %56 = vector.extract_strided_slice %25 {offsets = [5, 0], sizes = [1, 8], strides = [1, 1]} : vector<32x8xf32> to vector<1x8xf32>
    %57 = vector.broadcast %55 : vector<2x1xf32> to vector<2x8xf32>
    %58 = vector.broadcast %56 : vector<1x8xf32> to vector<2x8xf32>
    %59 = arith.mulf %57, %58 : vector<2x8xf32>
    %60 = arith.addf %54, %59 : vector<2x8xf32>
    %61 = vector.extract_strided_slice %2 {offsets = [0, 6], sizes = [2, 1], strides = [1, 1]} : vector<2x32xf32> to vector<2x1xf32>
    %62 = vector.extract_strided_slice %25 {offsets = [6, 0], sizes = [1, 8], strides = [1, 1]} : vector<32x8xf32> to vector<1x8xf32>
    %63 = vector.broadcast %61 : vector<2x1xf32> to vector<2x8xf32>
    %64 = vector.broadcast %62 : vector<1x8xf32> to vector<2x8xf32>
    %65 = arith.mulf %63, %64 : vector<2x8xf32>
    %66 = arith.addf %60, %65 : vector<2x8xf32>
    %67 = vector.extract_strided_slice %2 {offsets = [0, 7], sizes = [2, 1], strides = [1, 1]} : vector<2x32xf32> to vector<2x1xf32>
    %68 = vector.extract_strided_slice %25 {offsets = [7, 0], sizes = [1, 8], strides = [1, 1]} : vector<32x8xf32> to vector<1x8xf32>
    %69 = vector.broadcast %67 : vector<2x1xf32> to vector<2x8xf32>
    %70 = vector.broadcast %68 : vector<1x8xf32> to vector<2x8xf32>
    %71 = arith.mulf %69, %70 : vector<2x8xf32>
    %72 = arith.addf %66, %71 : vector<2x8xf32>
    %73 = vector.extract_strided_slice %2 {offsets = [0, 8], sizes = [2, 1], strides = [1, 1]} : vector<2x32xf32> to vector<2x1xf32>
    %74 = vector.extract_strided_slice %25 {offsets = [8, 0], sizes = [1, 8], strides = [1, 1]} : vector<32x8xf32> to vector<1x8xf32>
    %75 = vector.broadcast %73 : vector<2x1xf32> to vector<2x8xf32>
    %76 = vector.broadcast %74 : vector<1x8xf32> to vector<2x8xf32>
    %77 = arith.mulf %75, %76 : vector<2x8xf32>
    %78 = arith.addf %72, %77 : vector<2x8xf32>
    %79 = vector.extract_strided_slice %2 {offsets = [0, 9], sizes = [2, 1], strides = [1, 1]} : vector<2x32xf32> to vector<2x1xf32>
    %80 = vector.extract_strided_slice %25 {offsets = [9, 0], sizes = [1, 8], strides = [1, 1]} : vector<32x8xf32> to vector<1x8xf32>
    %81 = vector.broadcast %79 : vector<2x1xf32> to vector<2x8xf32>
    %82 = vector.broadcast %80 : vector<1x8xf32> to vector<2x8xf32>
    %83 = arith.mulf %81, %82 : vector<2x8xf32>
    %84 = arith.addf %78, %83 : vector<2x8xf32>
    %85 = vector.extract_strided_slice %2 {offsets = [0, 10], sizes = [2, 1], strides = [1, 1]} : vector<2x32xf32> to vector<2x1xf32>
    %86 = vector.extract_strided_slice %25 {offsets = [10, 0], sizes = [1, 8], strides = [1, 1]} : vector<32x8xf32> to vector<1x8xf32>
    %87 = vector.broadcast %85 : vector<2x1xf32> to vector<2x8xf32>
    %88 = vector.broadcast %86 : vector<1x8xf32> to vector<2x8xf32>
    %89 = arith.mulf %87, %88 : vector<2x8xf32>
    %90 = arith.addf %84, %89 : vector<2x8xf32>
    %91 = vector.extract_strided_slice %2 {offsets = [0, 11], sizes = [2, 1], strides = [1, 1]} : vector<2x32xf32> to vector<2x1xf32>
    %92 = vector.extract_strided_slice %25 {offsets = [11, 0], sizes = [1, 8], strides = [1, 1]} : vector<32x8xf32> to vector<1x8xf32>
    %93 = vector.broadcast %91 : vector<2x1xf32> to vector<2x8xf32>
    %94 = vector.broadcast %92 : vector<1x8xf32> to vector<2x8xf32>
    %95 = arith.mulf %93, %94 : vector<2x8xf32>
    %96 = arith.addf %90, %95 : vector<2x8xf32>
    %97 = vector.extract_strided_slice %2 {offsets = [0, 12], sizes = [2, 1], strides = [1, 1]} : vector<2x32xf32> to vector<2x1xf32>
    %98 = vector.extract_strided_slice %25 {offsets = [12, 0], sizes = [1, 8], strides = [1, 1]} : vector<32x8xf32> to vector<1x8xf32>
    %99 = vector.broadcast %97 : vector<2x1xf32> to vector<2x8xf32>
    %100 = vector.broadcast %98 : vector<1x8xf32> to vector<2x8xf32>
    %101 = arith.mulf %99, %100 : vector<2x8xf32>
    %102 = arith.addf %96, %101 : vector<2x8xf32>
    %103 = vector.extract_strided_slice %2 {offsets = [0, 13], sizes = [2, 1], strides = [1, 1]} : vector<2x32xf32> to vector<2x1xf32>
    %104 = vector.extract_strided_slice %25 {offsets = [13, 0], sizes = [1, 8], strides = [1, 1]} : vector<32x8xf32> to vector<1x8xf32>
    %105 = vector.broadcast %103 : vector<2x1xf32> to vector<2x8xf32>
    %106 = vector.broadcast %104 : vector<1x8xf32> to vector<2x8xf32>
    %107 = arith.mulf %105, %106 : vector<2x8xf32>
    %108 = arith.addf %102, %107 : vector<2x8xf32>
    %109 = vector.extract_strided_slice %2 {offsets = [0, 14], sizes = [2, 1], strides = [1, 1]} : vector<2x32xf32> to vector<2x1xf32>
    %110 = vector.extract_strided_slice %25 {offsets = [14, 0], sizes = [1, 8], strides = [1, 1]} : vector<32x8xf32> to vector<1x8xf32>
    %111 = vector.broadcast %109 : vector<2x1xf32> to vector<2x8xf32>
    %112 = vector.broadcast %110 : vector<1x8xf32> to vector<2x8xf32>
    %113 = arith.mulf %111, %112 : vector<2x8xf32>
    %114 = arith.addf %108, %113 : vector<2x8xf32>
    %115 = vector.extract_strided_slice %2 {offsets = [0, 15], sizes = [2, 1], strides = [1, 1]} : vector<2x32xf32> to vector<2x1xf32>
    %116 = vector.extract_strided_slice %25 {offsets = [15, 0], sizes = [1, 8], strides = [1, 1]} : vector<32x8xf32> to vector<1x8xf32>
    %117 = vector.broadcast %115 : vector<2x1xf32> to vector<2x8xf32>
    %118 = vector.broadcast %116 : vector<1x8xf32> to vector<2x8xf32>
    %119 = arith.mulf %117, %118 : vector<2x8xf32>
    %120 = arith.addf %114, %119 : vector<2x8xf32>
    %121 = vector.extract_strided_slice %2 {offsets = [0, 16], sizes = [2, 1], strides = [1, 1]} : vector<2x32xf32> to vector<2x1xf32>
    %122 = vector.extract_strided_slice %25 {offsets = [16, 0], sizes = [1, 8], strides = [1, 1]} : vector<32x8xf32> to vector<1x8xf32>
    %123 = vector.broadcast %121 : vector<2x1xf32> to vector<2x8xf32>
    %124 = vector.broadcast %122 : vector<1x8xf32> to vector<2x8xf32>
    %125 = arith.mulf %123, %124 : vector<2x8xf32>
    %126 = arith.addf %120, %125 : vector<2x8xf32>
    %127 = vector.extract_strided_slice %2 {offsets = [0, 17], sizes = [2, 1], strides = [1, 1]} : vector<2x32xf32> to vector<2x1xf32>
    %128 = vector.extract_strided_slice %25 {offsets = [17, 0], sizes = [1, 8], strides = [1, 1]} : vector<32x8xf32> to vector<1x8xf32>
    %129 = vector.broadcast %127 : vector<2x1xf32> to vector<2x8xf32>
    %130 = vector.broadcast %128 : vector<1x8xf32> to vector<2x8xf32>
    %131 = arith.mulf %129, %130 : vector<2x8xf32>
    %132 = arith.addf %126, %131 : vector<2x8xf32>
    %133 = vector.extract_strided_slice %2 {offsets = [0, 18], sizes = [2, 1], strides = [1, 1]} : vector<2x32xf32> to vector<2x1xf32>
    %134 = vector.extract_strided_slice %25 {offsets = [18, 0], sizes = [1, 8], strides = [1, 1]} : vector<32x8xf32> to vector<1x8xf32>
    %135 = vector.broadcast %133 : vector<2x1xf32> to vector<2x8xf32>
    %136 = vector.broadcast %134 : vector<1x8xf32> to vector<2x8xf32>
    %137 = arith.mulf %135, %136 : vector<2x8xf32>
    %138 = arith.addf %132, %137 : vector<2x8xf32>
    %139 = vector.extract_strided_slice %2 {offsets = [0, 19], sizes = [2, 1], strides = [1, 1]} : vector<2x32xf32> to vector<2x1xf32>
    %140 = vector.extract_strided_slice %25 {offsets = [19, 0], sizes = [1, 8], strides = [1, 1]} : vector<32x8xf32> to vector<1x8xf32>
    %141 = vector.broadcast %139 : vector<2x1xf32> to vector<2x8xf32>
    %142 = vector.broadcast %140 : vector<1x8xf32> to vector<2x8xf32>
    %143 = arith.mulf %141, %142 : vector<2x8xf32>
    %144 = arith.addf %138, %143 : vector<2x8xf32>
    %145 = vector.extract_strided_slice %2 {offsets = [0, 20], sizes = [2, 1], strides = [1, 1]} : vector<2x32xf32> to vector<2x1xf32>
    %146 = vector.extract_strided_slice %25 {offsets = [20, 0], sizes = [1, 8], strides = [1, 1]} : vector<32x8xf32> to vector<1x8xf32>
    %147 = vector.broadcast %145 : vector<2x1xf32> to vector<2x8xf32>
    %148 = vector.broadcast %146 : vector<1x8xf32> to vector<2x8xf32>
    %149 = arith.mulf %147, %148 : vector<2x8xf32>
    %150 = arith.addf %144, %149 : vector<2x8xf32>
    %151 = vector.extract_strided_slice %2 {offsets = [0, 21], sizes = [2, 1], strides = [1, 1]} : vector<2x32xf32> to vector<2x1xf32>
    %152 = vector.extract_strided_slice %25 {offsets = [21, 0], sizes = [1, 8], strides = [1, 1]} : vector<32x8xf32> to vector<1x8xf32>
    %153 = vector.broadcast %151 : vector<2x1xf32> to vector<2x8xf32>
    %154 = vector.broadcast %152 : vector<1x8xf32> to vector<2x8xf32>
    %155 = arith.mulf %153, %154 : vector<2x8xf32>
    %156 = arith.addf %150, %155 : vector<2x8xf32>
    %157 = vector.extract_strided_slice %2 {offsets = [0, 22], sizes = [2, 1], strides = [1, 1]} : vector<2x32xf32> to vector<2x1xf32>
    %158 = vector.extract_strided_slice %25 {offsets = [22, 0], sizes = [1, 8], strides = [1, 1]} : vector<32x8xf32> to vector<1x8xf32>
    %159 = vector.broadcast %157 : vector<2x1xf32> to vector<2x8xf32>
    %160 = vector.broadcast %158 : vector<1x8xf32> to vector<2x8xf32>
    %161 = arith.mulf %159, %160 : vector<2x8xf32>
    %162 = arith.addf %156, %161 : vector<2x8xf32>
    %163 = vector.extract_strided_slice %2 {offsets = [0, 23], sizes = [2, 1], strides = [1, 1]} : vector<2x32xf32> to vector<2x1xf32>
    %164 = vector.extract_strided_slice %25 {offsets = [23, 0], sizes = [1, 8], strides = [1, 1]} : vector<32x8xf32> to vector<1x8xf32>
    %165 = vector.broadcast %163 : vector<2x1xf32> to vector<2x8xf32>
    %166 = vector.broadcast %164 : vector<1x8xf32> to vector<2x8xf32>
    %167 = arith.mulf %165, %166 : vector<2x8xf32>
    %168 = arith.addf %162, %167 : vector<2x8xf32>
    %169 = vector.extract_strided_slice %2 {offsets = [0, 24], sizes = [2, 1], strides = [1, 1]} : vector<2x32xf32> to vector<2x1xf32>
    %170 = vector.extract_strided_slice %25 {offsets = [24, 0], sizes = [1, 8], strides = [1, 1]} : vector<32x8xf32> to vector<1x8xf32>
    %171 = vector.broadcast %169 : vector<2x1xf32> to vector<2x8xf32>
    %172 = vector.broadcast %170 : vector<1x8xf32> to vector<2x8xf32>
    %173 = arith.mulf %171, %172 : vector<2x8xf32>
    %174 = arith.addf %168, %173 : vector<2x8xf32>
    %175 = vector.extract_strided_slice %2 {offsets = [0, 25], sizes = [2, 1], strides = [1, 1]} : vector<2x32xf32> to vector<2x1xf32>
    %176 = vector.extract_strided_slice %25 {offsets = [25, 0], sizes = [1, 8], strides = [1, 1]} : vector<32x8xf32> to vector<1x8xf32>
    %177 = vector.broadcast %175 : vector<2x1xf32> to vector<2x8xf32>
    %178 = vector.broadcast %176 : vector<1x8xf32> to vector<2x8xf32>
    %179 = arith.mulf %177, %178 : vector<2x8xf32>
    %180 = arith.addf %174, %179 : vector<2x8xf32>
    %181 = vector.extract_strided_slice %2 {offsets = [0, 26], sizes = [2, 1], strides = [1, 1]} : vector<2x32xf32> to vector<2x1xf32>
    %182 = vector.extract_strided_slice %25 {offsets = [26, 0], sizes = [1, 8], strides = [1, 1]} : vector<32x8xf32> to vector<1x8xf32>
    %183 = vector.broadcast %181 : vector<2x1xf32> to vector<2x8xf32>
    %184 = vector.broadcast %182 : vector<1x8xf32> to vector<2x8xf32>
    %185 = arith.mulf %183, %184 : vector<2x8xf32>
    %186 = arith.addf %180, %185 : vector<2x8xf32>
    %187 = vector.extract_strided_slice %2 {offsets = [0, 27], sizes = [2, 1], strides = [1, 1]} : vector<2x32xf32> to vector<2x1xf32>
    %188 = vector.extract_strided_slice %25 {offsets = [27, 0], sizes = [1, 8], strides = [1, 1]} : vector<32x8xf32> to vector<1x8xf32>
    %189 = vector.broadcast %187 : vector<2x1xf32> to vector<2x8xf32>
    %190 = vector.broadcast %188 : vector<1x8xf32> to vector<2x8xf32>
    %191 = arith.mulf %189, %190 : vector<2x8xf32>
    %192 = arith.addf %186, %191 : vector<2x8xf32>
    %193 = vector.extract_strided_slice %2 {offsets = [0, 28], sizes = [2, 1], strides = [1, 1]} : vector<2x32xf32> to vector<2x1xf32>
    %194 = vector.extract_strided_slice %25 {offsets = [28, 0], sizes = [1, 8], strides = [1, 1]} : vector<32x8xf32> to vector<1x8xf32>
    %195 = vector.broadcast %193 : vector<2x1xf32> to vector<2x8xf32>
    %196 = vector.broadcast %194 : vector<1x8xf32> to vector<2x8xf32>
    %197 = arith.mulf %195, %196 : vector<2x8xf32>
    %198 = arith.addf %192, %197 : vector<2x8xf32>
    %199 = vector.extract_strided_slice %2 {offsets = [0, 29], sizes = [2, 1], strides = [1, 1]} : vector<2x32xf32> to vector<2x1xf32>
    %200 = vector.extract_strided_slice %25 {offsets = [29, 0], sizes = [1, 8], strides = [1, 1]} : vector<32x8xf32> to vector<1x8xf32>
    %201 = vector.broadcast %199 : vector<2x1xf32> to vector<2x8xf32>
    %202 = vector.broadcast %200 : vector<1x8xf32> to vector<2x8xf32>
    %203 = arith.mulf %201, %202 : vector<2x8xf32>
    %204 = arith.addf %198, %203 : vector<2x8xf32>
    %205 = vector.extract_strided_slice %2 {offsets = [0, 30], sizes = [2, 1], strides = [1, 1]} : vector<2x32xf32> to vector<2x1xf32>
    %206 = vector.extract_strided_slice %25 {offsets = [30, 0], sizes = [1, 8], strides = [1, 1]} : vector<32x8xf32> to vector<1x8xf32>
    %207 = vector.broadcast %205 : vector<2x1xf32> to vector<2x8xf32>
    %208 = vector.broadcast %206 : vector<1x8xf32> to vector<2x8xf32>
    %209 = arith.mulf %207, %208 : vector<2x8xf32>
    %210 = arith.addf %204, %209 : vector<2x8xf32>
    %211 = vector.extract_strided_slice %2 {offsets = [0, 31], sizes = [2, 1], strides = [1, 1]} : vector<2x32xf32> to vector<2x1xf32>
    %212 = vector.extract_strided_slice %25 {offsets = [31, 0], sizes = [1, 8], strides = [1, 1]} : vector<32x8xf32> to vector<1x8xf32>
    %213 = vector.broadcast %211 : vector<2x1xf32> to vector<2x8xf32>
    %214 = vector.broadcast %212 : vector<1x8xf32> to vector<2x8xf32>
    %215 = arith.mulf %213, %214 : vector<2x8xf32>
    %216 = arith.addf %210, %215 : vector<2x8xf32>
    %c0_13 = arith.constant 0 : index
    %c0_14 = arith.constant 0 : index
    %217 = vector.load %arg7[%c0_13, %c0_14] : memref<2x1xf32, #tpu.memory_space<vmem>>, vector<2x1xf32>
    %218 = vector.broadcast %217 : vector<2x1xf32> to vector<2x8xf32>
    %219 = arith.addf %216, %218 : vector<2x8xf32>
    %c0_15 = arith.constant 0 : index
    %c0_16 = arith.constant 0 : index
    %220 = vector.load %arg8[%c0_15, %c0_16] : memref<2x8xf32, #tpu.memory_space<vmem>>, vector<2x8xf32>
    tpu.vector_store %arg8[%c0_15, %c0_16], %219 {strides = array<i32>} : memref<2x8xf32, #tpu.memory_space<vmem>>, vector<2x8xf32>,
    return
  }
  func.func @transform_0(%arg0: i32) -> (i32, i32) {
    %c0_i32 = arith.constant 0 : i32
    %c0_i32_0 = arith.constant 0 : i32
    return %c0_i32, %arg0 : i32, i32
  }
  func.func @transform_1(%arg0: i32) -> (i32, i32) {
    %c0_i32 = arith.constant 0 : i32
    %c0_i32_0 = arith.constant 0 : i32
    %c0_i32_1 = arith.constant 0 : i32
    return %c0_i32, %c0_i32_0 : i32, i32
  }
  func.func @transform_2(%arg0: i32) -> (i32, i32) {
    %c0_i32 = arith.constant 0 : i32
    %c0_i32_0 = arith.constant 0 : i32
    %c0_i32_1 = arith.constant 0 : i32
    return %c0_i32, %c0_i32_0 : i32, i32
  }
  func.func @transform_3(%arg0: i32) -> (i32, i32) {
    %c0_i32 = arith.constant 0 : i32
    %c0_i32_0 = arith.constant 0 : i32
    %c0_i32_1 = arith.constant 0 : i32
    return %c0_i32, %c0_i32_0 : i32, i32
  }
  func.func @transform_4(%arg0: i32) -> (i32, i32) {
    %c0_i32 = arith.constant 0 : i32
    %c0_i32_0 = arith.constant 0 : i32
    %c0_i32_1 = arith.constant 0 : i32
    return %c0_i32, %c0_i32_0 : i32, i32
  }
  func.func @transform_5(%arg0: i32) -> (i32, i32) {
    %c0_i32 = arith.constant 0 : i32
    %c0_i32_0 = arith.constant 0 : i32
    %c0_i32_1 = arith.constant 0 : i32
    return %c0_i32, %c0_i32_0 : i32, i32
  }
  func.func @transform_6(%arg0: i32) -> (i32, i32) {
    %c0_i32 = arith.constant 0 : i32
    %c0_i32_0 = arith.constant 0 : i32
    %c0_i32_1 = arith.constant 0 : i32
    return %c0_i32, %c0_i32_0 : i32, i32
  }
  func.func @transform_7(%arg0: i32) -> (i32, i32) {
    %c0_i32 = arith.constant 0 : i32
    %c0_i32_0 = arith.constant 0 : i32
    return %c0_i32, %arg0 : i32, i32
  }
}

</mosaic_0001>

<llo_original>
// kernel: tpu_custom_call.1
$region0: #{tpu_custom_call.1}
  #allocation0 [shape = 'u32[]', space=smem, size = 0x4, offset = 0x4, fixed_abs, tag = 'smem constant byte address 0x4 - core index']
  #allocation1 [shape = 'u32[144,128]{1,0:T(1,128)}', space=vmem, size = 0x12000, scoped, tag = 'internal scratch']
  %s0 = inlined_call_operand.vmem [shape: f32[2,8], index: 0, kind: input, shape index: {}]
  %s1 = inlined_call_operand.vmem [shape: f32[64,2], index: 1, kind: input, shape index: {}]
  %s2 = inlined_call_operand.vmem [shape: f32[64,1], index: 2, kind: input, shape index: {}]
  %s3 = inlined_call_operand.vmem [shape: f32[32,64], index: 3, kind: input, shape index: {}]
  %s4 = inlined_call_operand.vmem [shape: f32[32,1], index: 4, kind: input, shape index: {}]
  %s5 = inlined_call_operand.vmem [shape: f32[2,32], index: 5, kind: input, shape index: {}]
  %s6 = inlined_call_operand.vmem [shape: f32[2,1], index: 6, kind: input, shape index: {}]
  %s7 = inlined_call_operand.hbm [shape: f32[2,8], index: 7, kind: output, shape index: {}]
  %s8 = sld [smem:[#allocation0]]
  $region38: #{tpu_custom_call.1} parent=0
    _
  %s10 = ssub.s32 1, %s8
  %s11 = scalar_select 0, %s10, %s8
  $region1: #{tpu_custom_call.1} parent=0
    #allocation2 [shape = 'u8[1024]{0}', space=vmem, size = 0x400, scoped, tag = 'output window, operand 0, single buffered']
    #allocation3 [shape = 's32[1]{0}', space=sflag, size = 0x4, scoped, tag = 'scoped memory for tpu_custom_call.1']
    %12 = vsyncpa [#allocation3], 0
    // Predicated region
    $region2: #{tpu_custom_call.1} parent=1 // pred_check
      _
    $region3: #{tpu_custom_call.1} parent=1 // pred_check_branch
      %14 = sbr.rel (0) target = $region5
    $region4: #{tpu_custom_call.1} parent=1 // pred_region
      _
    $region5: #{tpu_custom_call.1} parent=1 // pred_fallthru
      _
    // Predicated region
    $region6: #{tpu_custom_call.1} parent=1 // pred_check
      _
    $region7: #{tpu_custom_call.1} parent=1 // pred_check_branch
      %16 = sbr.rel (0) target = $region9
    $region8: #{tpu_custom_call.1} parent=1 // pred_region
      _
    $region9: #{tpu_custom_call.1} parent=1 // pred_fallthru
      _
    // Predicated region
    $region10: #{tpu_custom_call.1} parent=1 // pred_check
      _
    $region11: #{tpu_custom_call.1} parent=1 // pred_check_branch
      %18 = sbr.rel (0) target = $region13
    $region12: #{tpu_custom_call.1} parent=1 // pred_region
      _
    $region13: #{tpu_custom_call.1} parent=1 // pred_fallthru
      _
    // Predicated region
    $region14: #{tpu_custom_call.1} parent=1 // pred_check
      _
    $region15: #{tpu_custom_call.1} parent=1 // pred_check_branch
      %20 = sbr.rel (0) target = $region17
    $region16: #{tpu_custom_call.1} parent=1 // pred_region
      _
    $region17: #{tpu_custom_call.1} parent=1 // pred_fallthru
      _
    // Predicated region
    $region18: #{tpu_custom_call.1} parent=1 // pred_check
      _
    $region19: #{tpu_custom_call.1} parent=1 // pred_check_branch
      %22 = sbr.rel (0) target = $region21
    $region20: #{tpu_custom_call.1} parent=1 // pred_region
      _
    $region21: #{tpu_custom_call.1} parent=1 // pred_fallthru
      _
    // Predicated region
    $region22: #{tpu_custom_call.1} parent=1 // pred_check
      _
    $region23: #{tpu_custom_call.1} parent=1 // pred_check_branch
      %24 = sbr.rel (0) target = $region25
    $region24: #{tpu_custom_call.1} parent=1 // pred_region
      _
    $region25: #{tpu_custom_call.1} parent=1 // pred_fallthru
      _
    // Predicated region
    $region26: #{tpu_custom_call.1} parent=1 // pred_check
      _
    $region27: #{tpu_custom_call.1} parent=1 // pred_check_branch
      %26 = sbr.rel (0) target = $region29
    $region28: #{tpu_custom_call.1} parent=1 // pred_region
      _
    $region29: #{tpu_custom_call.1} parent=1 // pred_fallthru
      _
    %v27 = vld [vmem:[%s0] sm:$0x3]
    %v28 = vld [vmem:[%s1] sm:$0xff]
    %v29 = vld [vmem:[%s1 + $0x8] sm:$0xff]
    %v30 = vld [vmem:[%s1 + $0x10] sm:$0xff]
    %v31 = vld [vmem:[%s1 + $0x18] sm:$0xff]
    %v32 = vld [vmem:[%s1 + $0x20] sm:$0xff]
    %v33 = vld [vmem:[%s1 + $0x28] sm:$0xff]
    %v34 = vld [vmem:[%s1 + $0x30] sm:$0xff]
    %v35 = vld [vmem:[%s1 + $0x38] sm:$0xff]
    %v36 = vld [vmem:[%s5] sm:$0x3]
    %38 = vset.pattern.permute.xlu0 0
    %39 = vperm.xlu0 %38, %v28
    %v40 = vpop.permute.xlu0 %39
    %43 = vset.pattern.permute.xlu0 0
    %44 = vperm.xlu0 %43, %v29
    %v45 = vpop.permute.xlu0 %44
    %48 = vset.pattern.permute.xlu0 0
    %49 = vperm.xlu0 %48, %v30
    %v50 = vpop.permute.xlu0 %49
    %53 = vset.pattern.permute.xlu0 0
    %54 = vperm.xlu0 %53, %v31
    %v55 = vpop.permute.xlu0 %54
    %58 = vset.pattern.permute.xlu0 0
    %59 = vperm.xlu0 %58, %v32
    %v60 = vpop.permute.xlu0 %59
    %63 = vset.pattern.permute.xlu0 0
    %64 = vperm.xlu0 %63, %v33
    %v65 = vpop.permute.xlu0 %64
    %68 = vset.pattern.permute.xlu0 0
    %69 = vperm.xlu0 %68, %v34
    %v70 = vpop.permute.xlu0 %69
    %73 = vset.pattern.permute.xlu0 0
    %74 = vperm.xlu0 %73, %v35
    %v75 = vpop.permute.xlu0 %74
    %v77 = vlaneseq
    %v78 = vshrl.u32 %v77, 7
    %v79 = vsub.s32 0, %v78
    %v80 = vrot.slane %v27, %v79
    %v81 = vmul.f32 %v40, %v80
    %v82 = vmul.f32 %v45, %v80
    %v83 = vmul.f32 %v50, %v80
    %v84 = vmul.f32 %v55, %v80
    %v85 = vmul.f32 %v60, %v80
    %v86 = vmul.f32 %v65, %v80
    %v87 = vmul.f32 %v70, %v80
    %v88 = vmul.f32 %v75, %v80
    %89 = vset.pattern.permute.xlu0 1
    %90 = vperm.xlu0 %89, %v28
    %v91 = vpop.permute.xlu0 %90
    %93 = vset.pattern.permute.xlu0 1
    %94 = vperm.xlu0 %93, %v29
    %v95 = vpop.permute.xlu0 %94
    %97 = vset.pattern.permute.xlu0 1
    %98 = vperm.xlu0 %97, %v30
    %v99 = vpop.permute.xlu0 %98
    %101 = vset.pattern.permute.xlu0 1
    %102 = vperm.xlu0 %101, %v31
    %v103 = vpop.permute.xlu0 %102
    %105 = vset.pattern.permute.xlu0 1
    %106 = vperm.xlu0 %105, %v32
    %v107 = vpop.permute.xlu0 %106
    %109 = vset.pattern.permute.xlu0 1
    %110 = vperm.xlu0 %109, %v33
    %v111 = vpop.permute.xlu0 %110
    %113 = vset.pattern.permute.xlu0 1
    %114 = vperm.xlu0 %113, %v34
    %v115 = vpop.permute.xlu0 %114
    %117 = vset.pattern.permute.xlu0 1
    %118 = vperm.xlu0 %117, %v35
    %v119 = vpop.permute.xlu0 %118
    %v121 = vlaneseq
    %v122 = vshrl.u32 %v121, 7
    %v123 = vsub.s32 1, %v122
    %v124 = vrot.slane %v27, %v123
    %v125 = vmul.f32 %v91, %v124
    %v126 = vmul.f32 %v95, %v124
    %v127 = vmul.f32 %v99, %v124
    %v128 = vmul.f32 %v103, %v124
    %v129 = vmul.f32 %v107, %v124
    %v130 = vmul.f32 %v111, %v124
    %v131 = vmul.f32 %v115, %v124
    %v132 = vmul.f32 %v119, %v124
    %v133 = vadd.f32 %v81, %v125
    %v134 = vadd.f32 %v82, %v126
    %v135 = vadd.f32 %v83, %v127
    %v136 = vadd.f32 %v84, %v128
    %v137 = vadd.f32 %v85, %v129
    %v138 = vadd.f32 %v86, %v130
    %v139 = vadd.f32 %v87, %v131
    %v140 = vadd.f32 %v88, %v132
    %v141 = vld [vmem:[%s2] sm:$0xff]
    %v142 = vld [vmem:[%s2 + $0x8] sm:$0xff]
    %v143 = vld [vmem:[%s2 + $0x10] sm:$0xff]
    %v144 = vld [vmem:[%s2 + $0x18] sm:$0xff]
    %v145 = vld [vmem:[%s2 + $0x20] sm:$0xff]
    %v146 = vld [vmem:[%s2 + $0x28] sm:$0xff]
    %v147 = vld [vmem:[%s2 + $0x30] sm:$0xff]
    %v148 = vld [vmem:[%s2 + $0x38] sm:$0xff]
    %150 = vset.pattern.permute.xlu0 0
    %151 = vperm.xlu0 %150, %v141
    %v152 = vpop.permute.xlu0 %151
    %155 = vset.pattern.permute.xlu0 0
    %156 = vperm.xlu0 %155, %v142
    %v157 = vpop.permute.xlu0 %156
    %160 = vset.pattern.permute.xlu0 0
    %161 = vperm.xlu0 %160, %v143
    %v162 = vpop.permute.xlu0 %161
    %165 = vset.pattern.permute.xlu0 0
    %166 = vperm.xlu0 %165, %v144
    %v167 = vpop.permute.xlu0 %166
    %170 = vset.pattern.permute.xlu0 0
    %171 = vperm.xlu0 %170, %v145
    %v172 = vpop.permute.xlu0 %171
    %175 = vset.pattern.permute.xlu0 0
    %176 = vperm.xlu0 %175, %v146
    %v177 = vpop.permute.xlu0 %176
    %180 = vset.pattern.permute.xlu0 0
    %181 = vperm.xlu0 %180, %v147
    %v182 = vpop.permute.xlu0 %181
    %185 = vset.pattern.permute.xlu0 0
    %186 = vperm.xlu0 %185, %v148
    %v187 = vpop.permute.xlu0 %186
    %v189 = vadd.f32 %v133, %v152
    %v190 = vadd.f32 %v134, %v157
    %v191 = vadd.f32 %v135, %v162
    %v192 = vadd.f32 %v136, %v167
    %v193 = vadd.f32 %v137, %v172
    %v194 = vadd.f32 %v138, %v177
    %v195 = vadd.f32 %v139, %v182
    %v196 = vadd.f32 %v140, %v187
    %v197 = vmax.f32 %v189, 0.0
    %v198 = vmax.f32 %v190, 0.0
    %v199 = vmax.f32 %v191, 0.0
    %v200 = vmax.f32 %v192, 0.0
    %v201 = vmax.f32 %v193, 0.0
    %v202 = vmax.f32 %v194, 0.0
    %v203 = vmax.f32 %v195, 0.0
    %v204 = vmax.f32 %v196, 0.0
    %v205 = vld [vmem:[%s3] sm:$0xff]
    %v206 = vld [vmem:[%s3 + $0x8] sm:$0xff]
    %v207 = vld [vmem:[%s3 + $0x10] sm:$0xff]
    %v208 = vld [vmem:[%s3 + $0x18] sm:$0xff]
    %v209 = vld [vmem:[%s4] sm:$0xff]
    %v210 = vld [vmem:[%s4 + $0x8] sm:$0xff]
    %v211 = vld [vmem:[%s4 + $0x10] sm:$0xff]
    %v212 = vld [vmem:[%s4 + $0x18] sm:$0xff]
    %214 = vset.pattern.permute.xlu0 0
    %215 = vperm.xlu0 %214, %v209
    %v216 = vpop.permute.xlu0 %215
    %219 = vset.pattern.permute.xlu0 0
    %220 = vperm.xlu0 %219, %v210
    %v221 = vpop.permute.xlu0 %220
    %224 = vset.pattern.permute.xlu0 0
    %225 = vperm.xlu0 %224, %v211
    %v226 = vpop.permute.xlu0 %225
    %229 = vset.pattern.permute.xlu0 0
    %230 = vperm.xlu0 %229, %v212
    %v231 = vpop.permute.xlu0 %230
    %vm233 = vcmask 523264
    %v235 = vsel %vm233, %v205, 0
    %v238 = vsel %vm233, %v206, 0
    %v241 = vsel %vm233, %v207, 0
    %v244 = vsel %vm233, %v208, 0
    %246 = vmatprep.subr.mxu0 0.0
    %247 = vmatpush1.msra.mxu0 %v197
    %248 = vmatprep.subr.mxu0 0.0
    %249 = vmatpush1.msra.mxu0 %v198
    %250 = vmatprep.subr.mxu0 0.0
    %251 = vmatpush1.msra.mxu0 %v199
    %252 = vmatprep.subr.mxu0 0.0
    %253 = vmatpush1.msra.mxu0 %v200
    %254 = vmatprep.subr.mxu0 0.0
    %255 = vmatpush1.msra.mxu0 %v201
    %256 = vmatprep.subr.mxu0 0.0
    %257 = vmatpush1.msra.mxu0 %v202
    %258 = vmatprep.subr.mxu0 0.0
    %259 = vmatpush1.msra.mxu0 %v203
    %260 = vmatprep.subr.mxu0 0.0
    %261 = vmatpush1.msra.mxu0 %v204
    %262 = vmatprep.subr.mxu0 0.0
    %263 = vmatpush1.msra.mxu0 0.0
    %264 = vmatprep.subr.mxu0 0.0
    %265 = vmatpush1.msra.mxu0 0.0
    %266 = vmatprep.subr.mxu0 0.0
    %267 = vmatpush1.msra.mxu0 0.0
    %268 = vmatprep.subr.mxu0 0.0
    %269 = vmatpush1.msra.mxu0 0.0
    %270 = vmatprep.subr.mxu0 0.0
    %271 = vmatpush1.msra.mxu0 0.0
    %272 = vmatprep.subr.mxu0 0.0
    %273 = vmatpush1.msra.mxu0 0.0
    %274 = vmatprep.subr.mxu0 0.0
    %275 = vmatpush1.msra.mxu0 0.0
    %276 = vmatprep.subr.mxu0 0.0
    %277 = vmatpush1.msra.mxu0 0.0
    %278 = vmatprep.subr.mxu0 0.0
    %279 = vmatpush1.msra.mxu0 0.0
    %280 = vmatprep.subr.mxu0 0.0
    %281 = vmatpush1.msra.mxu0 0.0
    %282 = vmatprep.subr.mxu0 0.0
    %283 = vmatpush1.msra.mxu0 0.0
    %284 = vmatprep.subr.mxu0 0.0
    %285 = vmatpush1.msra.mxu0 0.0
    %286 = vmatprep.subr.mxu0 0.0
    %287 = vmatpush1.msra.mxu0 0.0
    %288 = vmatprep.subr.mxu0 0.0
    %289 = vmatpush1.msra.mxu0 0.0
    %290 = vmatprep.subr.mxu0 0.0
    %291 = vmatpush1.msra.mxu0 0.0
    %292 = vmatprep.subr.mxu0 0.0
    %293 = vmatpush1.msra.mxu0 0.0
    %294 = vmatprep.subr.mxu0 0.0
    %295 = vmatpush1.msra.mxu0 0.0
    %296 = vmatprep.subr.mxu0 0.0
    %297 = vmatpush1.msra.mxu0 0.0
    %298 = vmatprep.subr.mxu0 0.0
    %299 = vmatpush1.msra.mxu0 0.0
    %300 = vmatprep.subr.mxu0 0.0
    %301 = vmatpush1.msra.mxu0 0.0
    %302 = vmatprep.subr.mxu0 0.0
    %303 = vmatpush1.msra.mxu0 0.0
    %304 = vmatprep.subr.mxu0 0.0
    %305 = vmatpush1.msra.mxu0 0.0
    %306 = vmatprep.subr.mxu0 0.0
    %307 = vmatpush1.msra.mxu0 0.0
    %308 = vmatprep.subr.mxu0 0.0
    %309 = vmatpush1.msra.mxu0 0.0
    %310 = vmatprep.mubr.f32.mxu0 0.0
    %311 = vmatmul.mubr.f32.gmra.mrb[0].mxu0 %v235
    %v312 = vpop.f32.mrb[0].mxu0
    %v313 = vadd.f32 %v216, %v312
    %v314 = vpop.f32.mrb[0].mxu0
    %315 = vmatprep.mubr.f32.mxu0 0.0
    %316 = vmatmul.mubr.f32.gmra.mrb[0].mxu0 %v238
    %v317 = vpop.f32.mrb[0].mxu0
    %v318 = vadd.f32 %v221, %v317
    %v319 = vpop.f32.mrb[0].mxu0
    %320 = vmatprep.mubr.f32.mxu0 0.0
    %321 = vmatmul.mubr.f32.gmra.mrb[0].mxu0 %v241
    %v322 = vpop.f32.mrb[0].mxu0
    %v323 = vadd.f32 %v226, %v322
    %v324 = vpop.f32.mrb[0].mxu0
    %325 = vmatprep.mubr.f32.mxu0 0.0
    %326 = vmatmul.mubr.f32.gmra.mrb[0].mxu0 %v244
    %v327 = vpop.f32.mrb[0].mxu0
    %v328 = vadd.f32 %v231, %v327
    %v329 = vpop.f32.mrb[0].mxu0
    %330 = vdwg.mxu0
    %v331 = vmax.f32 %v313, 0.0
    %v332 = vmax.f32 %v318, 0.0
    %v333 = vmax.f32 %v323, 0.0
    %v334 = vmax.f32 %v328, 0.0
    %336 = vset.pattern.permute.xlu0 0
    %337 = vperm.xlu0 %336, %v36
    %v338 = vpop.permute.xlu0 %337
    %v340 = vlaneseq
    %v341 = vshrl.u32 %v340, 7
    %v342 = vsub.s32 0, %v341
    %v343 = vrot.slane %v331, %v342
    %v344 = vmul.f32 %v338, %v343
    %345 = vset.pattern.permute.xlu0 1
    %346 = vperm.xlu0 %345, %v36
    %v347 = vpop.permute.xlu0 %346
    %v349 = vlaneseq
    %v350 = vshrl.u32 %v349, 7
    %v351 = vsub.s32 1, %v350
    %v352 = vrot.slane %v331, %v351
    %v353 = vmul.f32 %v347, %v352
    %v354 = vadd.f32 %v344, %v353
    %355 = vset.pattern.permute.xlu0 2
    %356 = vperm.xlu0 %355, %v36
    %v357 = vpop.permute.xlu0 %356
    %v359 = vlaneseq
    %v360 = vshrl.u32 %v359, 7
    %v361 = vsub.s32 2, %v360
    %v362 = vrot.slane %v331, %v361
    %v363 = vmul.f32 %v357, %v362
    %v364 = vadd.f32 %v354, %v363
    %365 = vset.pattern.permute.xlu0 3
    %366 = vperm.xlu0 %365, %v36
    %v367 = vpop.permute.xlu0 %366
    %v369 = vlaneseq
    %v370 = vshrl.u32 %v369, 7
    %v371 = vsub.s32 3, %v370
    %v372 = vrot.slane %v331, %v371
    %v373 = vmul.f32 %v367, %v372
    %v374 = vadd.f32 %v364, %v373
    %375 = vset.pattern.permute.xlu0 4
    %376 = vperm.xlu0 %375, %v36
    %v377 = vpop.permute.xlu0 %376
    %v379 = vlaneseq
    %v380 = vshrl.u32 %v379, 7
    %v381 = vsub.s32 4, %v380
    %v382 = vrot.slane %v331, %v381
    %v383 = vmul.f32 %v377, %v382
    %v384 = vadd.f32 %v374, %v383
    %385 = vset.pattern.permute.xlu0 5
    %386 = vperm.xlu0 %385, %v36
    %v387 = vpop.permute.xlu0 %386
    %v389 = vlaneseq
    %v390 = vshrl.u32 %v389, 7
    %v391 = vsub.s32 5, %v390
    %v392 = vrot.slane %v331, %v391
    %v393 = vmul.f32 %v387, %v392
    %v394 = vadd.f32 %v384, %v393
    %395 = vset.pattern.permute.xlu0 6
    %396 = vperm.xlu0 %395, %v36
    %v397 = vpop.permute.xlu0 %396
    %v399 = vlaneseq
    %v400 = vshrl.u32 %v399, 7
    %v401 = vsub.s32 6, %v400
    %v402 = vrot.slane %v331, %v401
    %v403 = vmul.f32 %v397, %v402
    %v404 = vadd.f32 %v394, %v403
    %405 = vset.pattern.permute.xlu0 7
    %406 = vperm.xlu0 %405, %v36
    %v407 = vpop.permute.xlu0 %406
    %v409 = vlaneseq
    %v410 = vshrl.u32 %v409, 7
    %v411 = vsub.s32 7, %v410
    %v412 = vrot.slane %v331, %v411
    %v413 = vmul.f32 %v407, %v412
    %v414 = vadd.f32 %v404, %v413
    %415 = vset.pattern.permute.xlu0 8
    %416 = vperm.xlu0 %415, %v36
    %v417 = vpop.permute.xlu0 %416
    %v419 = vlaneseq
    %v420 = vshrl.u32 %v419, 7
    %v421 = vsub.s32 0, %v420
    %v422 = vrot.slane %v332, %v421
    %v423 = vmul.f32 %v417, %v422
    %v424 = vadd.f32 %v414, %v423
    %425 = vset.pattern.permute.xlu0 9
    %426 = vperm.xlu0 %425, %v36
    %v427 = vpop.permute.xlu0 %426
    %v429 = vlaneseq
    %v430 = vshrl.u32 %v429, 7
    %v431 = vsub.s32 1, %v430
    %v432 = vrot.slane %v332, %v431
    %v433 = vmul.f32 %v427, %v432
    %v434 = vadd.f32 %v424, %v433
    %435 = vset.pattern.permute.xlu0 10
    %436 = vperm.xlu0 %435, %v36
    %v437 = vpop.permute.xlu0 %436
    %v439 = vlaneseq
    %v440 = vshrl.u32 %v439, 7
    %v441 = vsub.s32 2, %v440
    %v442 = vrot.slane %v332, %v441
    %v443 = vmul.f32 %v437, %v442
    %v444 = vadd.f32 %v434, %v443
    %445 = vset.pattern.permute.xlu0 11
    %446 = vperm.xlu0 %445, %v36
    %v447 = vpop.permute.xlu0 %446
    %v449 = vlaneseq
    %v450 = vshrl.u32 %v449, 7
    %v451 = vsub.s32 3, %v450
    %v452 = vrot.slane %v332, %v451
    %v453 = vmul.f32 %v447, %v452
    %v454 = vadd.f32 %v444, %v453
    %455 = vset.pattern.permute.xlu0 12
    %456 = vperm.xlu0 %455, %v36
    %v457 = vpop.permute.xlu0 %456
    %v459 = vlaneseq
    %v460 = vshrl.u32 %v459, 7
    %v461 = vsub.s32 4, %v460
    %v462 = vrot.slane %v332, %v461
    %v463 = vmul.f32 %v457, %v462
    %v464 = vadd.f32 %v454, %v463
    %465 = vset.pattern.permute.xlu0 13
    %466 = vperm.xlu0 %465, %v36
    %v467 = vpop.permute.xlu0 %466
    %v469 = vlaneseq
    %v470 = vshrl.u32 %v469, 7
    %v471 = vsub.s32 5, %v470
    %v472 = vrot.slane %v332, %v471
    %v473 = vmul.f32 %v467, %v472
    %v474 = vadd.f32 %v464, %v473
    %475 = vset.pattern.permute.xlu0 14
    %476 = vperm.xlu0 %475, %v36
    %v477 = vpop.permute.xlu0 %476
    %v479 = vlaneseq
    %v480 = vshrl.u32 %v479, 7
    %v481 = vsub.s32 6, %v480
    %v482 = vrot.slane %v332, %v481
    %v483 = vmul.f32 %v477, %v482
    %v484 = vadd.f32 %v474, %v483
    %485 = vset.pattern.permute.xlu0 15
    %486 = vperm.xlu0 %485, %v36
    %v487 = vpop.permute.xlu0 %486
    %v489 = vlaneseq
    %v490 = vshrl.u32 %v489, 7
    %v491 = vsub.s32 7, %v490
    %v492 = vrot.slane %v332, %v491
    %v493 = vmul.f32 %v487, %v492
    %v494 = vadd.f32 %v484, %v493
    %495 = vset.pattern.permute.xlu0 16
    %496 = vperm.xlu0 %495, %v36
    %v497 = vpop.permute.xlu0 %496
    %v499 = vlaneseq
    %v500 = vshrl.u32 %v499, 7
    %v501 = vsub.s32 0, %v500
    %v502 = vrot.slane %v333, %v501
    %v503 = vmul.f32 %v497, %v502
    %v504 = vadd.f32 %v494, %v503
    %505 = vset.pattern.permute.xlu0 17
    %506 = vperm.xlu0 %505, %v36
    %v507 = vpop.permute.xlu0 %506
    %v509 = vlaneseq
    %v510 = vshrl.u32 %v509, 7
    %v511 = vsub.s32 1, %v510
    %v512 = vrot.slane %v333, %v511
    %v513 = vmul.f32 %v507, %v512
    %v514 = vadd.f32 %v504, %v513
    %515 = vset.pattern.permute.xlu0 18
    %516 = vperm.xlu0 %515, %v36
    %v517 = vpop.permute.xlu0 %516
    %v519 = vlaneseq
    %v520 = vshrl.u32 %v519, 7
    %v521 = vsub.s32 2, %v520
    %v522 = vrot.slane %v333, %v521
    %v523 = vmul.f32 %v517, %v522
    %v524 = vadd.f32 %v514, %v523
    %525 = vset.pattern.permute.xlu0 19
    %526 = vperm.xlu0 %525, %v36
    %v527 = vpop.permute.xlu0 %526
    %v529 = vlaneseq
    %v530 = vshrl.u32 %v529, 7
    %v531 = vsub.s32 3, %v530
    %v532 = vrot.slane %v333, %v531
    %v533 = vmul.f32 %v527, %v532
    %v534 = vadd.f32 %v524, %v533
    %535 = vset.pattern.permute.xlu0 20
    %536 = vperm.xlu0 %535, %v36
    %v537 = vpop.permute.xlu0 %536
    %v539 = vlaneseq
    %v540 = vshrl.u32 %v539, 7
    %v541 = vsub.s32 4, %v540
    %v542 = vrot.slane %v333, %v541
    %v543 = vmul.f32 %v537, %v542
    %v544 = vadd.f32 %v534, %v543
    %545 = vset.pattern.permute.xlu0 21
    %546 = vperm.xlu0 %545, %v36
    %v547 = vpop.permute.xlu0 %546
    %v549 = vlaneseq
    %v550 = vshrl.u32 %v549, 7
    %v551 = vsub.s32 5, %v550
    %v552 = vrot.slane %v333, %v551
    %v553 = vmul.f32 %v547, %v552
    %v554 = vadd.f32 %v544, %v553
    %555 = vset.pattern.permute.xlu0 22
    %556 = vperm.xlu0 %555, %v36
    %v557 = vpop.permute.xlu0 %556
    %v559 = vlaneseq
    %v560 = vshrl.u32 %v559, 7
    %v561 = vsub.s32 6, %v560
    %v562 = vrot.slane %v333, %v561
    %v563 = vmul.f32 %v557, %v562
    %v564 = vadd.f32 %v554, %v563
    %565 = vset.pattern.permute.xlu0 23
    %566 = vperm.xlu0 %565, %v36
    %v567 = vpop.permute.xlu0 %566
    %v569 = vlaneseq
    %v570 = vshrl.u32 %v569, 7
    %v571 = vsub.s32 7, %v570
    %v572 = vrot.slane %v333, %v571
    %v573 = vmul.f32 %v567, %v572
    %v574 = vadd.f32 %v564, %v573
    %575 = vset.pattern.permute.xlu0 24
    %576 = vperm.xlu0 %575, %v36
    %v577 = vpop.permute.xlu0 %576
    %v579 = vlaneseq
    %v580 = vshrl.u32 %v579, 7
    %v581 = vsub.s32 0, %v580
    %v582 = vrot.slane %v334, %v581
    %v583 = vmul.f32 %v577, %v582
    %v584 = vadd.f32 %v574, %v583
    %585 = vset.pattern.permute.xlu0 25
    %586 = vperm.xlu0 %585, %v36
    %v587 = vpop.permute.xlu0 %586
    %v589 = vlaneseq
    %v590 = vshrl.u32 %v589, 7
    %v591 = vsub.s32 1, %v590
    %v592 = vrot.slane %v334, %v591
    %v593 = vmul.f32 %v587, %v592
    %v594 = vadd.f32 %v584, %v593
    %595 = vset.pattern.permute.xlu0 26
    %596 = vperm.xlu0 %595, %v36
    %v597 = vpop.permute.xlu0 %596
    %v599 = vlaneseq
    %v600 = vshrl.u32 %v599, 7
    %v601 = vsub.s32 2, %v600
    %v602 = vrot.slane %v334, %v601
    %v603 = vmul.f32 %v597, %v602
    %v604 = vadd.f32 %v594, %v603
    %605 = vset.pattern.permute.xlu0 27
    %606 = vperm.xlu0 %605, %v36
    %v607 = vpop.permute.xlu0 %606
    %v609 = vlaneseq
    %v610 = vshrl.u32 %v609, 7
    %v611 = vsub.s32 3, %v610
    %v612 = vrot.slane %v334, %v611
    %v613 = vmul.f32 %v607, %v612
    %v614 = vadd.f32 %v604, %v613
    %615 = vset.pattern.permute.xlu0 28
    %616 = vperm.xlu0 %615, %v36
    %v617 = vpop.permute.xlu0 %616
    %v619 = vlaneseq
    %v620 = vshrl.u32 %v619, 7
    %v621 = vsub.s32 4, %v620
    %v622 = vrot.slane %v334, %v621
    %v623 = vmul.f32 %v617, %v622
    %v624 = vadd.f32 %v614, %v623
    %625 = vset.pattern.permute.xlu0 29
    %626 = vperm.xlu0 %625, %v36
    %v627 = vpop.permute.xlu0 %626
    %v629 = vlaneseq
    %v630 = vshrl.u32 %v629, 7
    %v631 = vsub.s32 5, %v630
    %v632 = vrot.slane %v334, %v631
    %v633 = vmul.f32 %v627, %v632
    %v634 = vadd.f32 %v624, %v633
    %635 = vset.pattern.permute.xlu0 30
    %636 = vperm.xlu0 %635, %v36
    %v637 = vpop.permute.xlu0 %636
    %v639 = vlaneseq
    %v640 = vshrl.u32 %v639, 7
    %v641 = vsub.s32 6, %v640
    %v642 = vrot.slane %v334, %v641
    %v643 = vmul.f32 %v637, %v642
    %v644 = vadd.f32 %v634, %v643
    %645 = vset.pattern.permute.xlu0 31
    %646 = vperm.xlu0 %645, %v36
    %v647 = vpop.permute.xlu0 %646
    %v649 = vlaneseq
    %v650 = vshrl.u32 %v649, 7
    %v651 = vsub.s32 7, %v650
    %v652 = vrot.slane %v334, %v651
    %v653 = vmul.f32 %v647, %v652
    %v654 = vadd.f32 %v644, %v653
    %v655 = vld [vmem:[%s6] sm:$0x3]
    %657 = vset.pattern.permute.xlu0 0
    %658 = vperm.xlu0 %657, %v655
    %v659 = vpop.permute.xlu0 %658
    %v661 = vadd.f32 %v654, %v659
    %vm662 = vcmask 58368
    %663 = vst.msk [vmem:[#allocation2] sm:$0x3] %vm662, %v661
    // Predicated region
    $region30: #{tpu_custom_call.1} parent=1 // pred_check
      _
    $region31: #{tpu_custom_call.1} parent=1 // pred_check_branch
      %665 = sbr.rel (0) target = $region33
    $region32: #{tpu_custom_call.1} parent=1 // pred_region
      %s667 = ssub.s32 32, 32
      %668 = vsyncadd [#allocation3], %s667
      %s670 = sshll.u32 [#allocation2], 4
      %s671 = int_to_ptr.vmem [resolvable:$true] %s670
      %673 = dma.vmem_to_hbm [thread:$0]  %s671, 32, %s7, [#allocation3]
    $region33: #{tpu_custom_call.1} parent=1 // pred_fallthru
      _
    // Predicated region
    $region34: #{tpu_custom_call.1} parent=1 // pred_check
      _
    $region35: #{tpu_custom_call.1} parent=1 // pred_check_branch
      %675 = sbr.rel (0) target = $region37
    $region36: #{tpu_custom_call.1} parent=1 // pred_region
      %676 = dma.done [#allocation3], 32
    $region37: #{tpu_custom_call.1} parent=1 // pred_fallthru
      _
    %677 = vsyncpa [#allocation3], 1

</llo_original>
